<compile_context>
chip_gen: v7x
topology: tpu7x:2x2x1
jax: 0.10.0
libtpu: 0.0.40
codegen_flags: <defaults>
</compile_context>

<pallas_src>
import jax
import jax.numpy as jnp
from jax.experimental import pallas as pl
from jax.experimental.pallas import tpu as pltpu

IN_DIM = 21 * 4      # 84
H_DIM = 32
Z_DIM = 16
OUT_DIM = 13 * 4     # 52
SLAB_DIM = OUT_DIM + 2 * Z_DIM   # 84: [recon 0:52 | mu 52:68 | logvar 68:84]


def _round_down(n, m):
    return n - (n % m)


def _vae_kernel(x_ref, eps_ref,
                w1_ref, b1_ref,
                w_enc_ref, b_enc_ref,
                w3_ref, b3_ref,
                w4_ref, b4_ref,
                out_ref):
    # I/O may be bf16; all compute/accumulation is f32.
    x = x_ref[...].astype(jnp.float32)

    # ---- encode -----------------------------------------------------------
    h1 = jnp.dot(x, w1_ref[...], preferred_element_type=jnp.float32) + b1_ref[...]
    h1 = jnp.maximum(h1, 0.0)                                     # F.relu
    # fused [mu | logvar] head: one 32-wide MXU push
    ml = jnp.dot(h1, w_enc_ref[...], preferred_element_type=jnp.float32) + b_enc_ref[...]
    mu = ml[:, :Z_DIM]
    logvar = ml[:, Z_DIM:]

    # ---- reparameterize (eps ~ N(0,1), supplied by host == randn_like) -----
    eps = eps_ref[...].astype(jnp.float32)
    z = mu + eps * jnp.exp(0.5 * logvar)

    # ---- decode -------------------------------------------------------------
    h3 = jnp.dot(z, w3_ref[...], preferred_element_type=jnp.float32) + b3_ref[...]
    h3 = jnp.maximum(h3, 0.0)                                     # F.relu
    logits = jnp.dot(h3, w4_ref[...], preferred_element_type=jnp.float32) + b4_ref[...]
    # exact sigmoid as a single EUP op (tanh); EUP has large slack here.
    recon = 0.5 * jnp.tanh(0.5 * logits) + 0.5

    # direct sub-slice stores into the 84-lane slab (no concat, no zero pad).
    out_ref[:, :OUT_DIM] = recon.astype(out_ref.dtype)
    out_ref[:, OUT_DIM:] = ml.astype(out_ref.dtype)


def vae_forward(x, eps, params, *, block_b=4096):
    """x: (B, 84), eps: (B, 16) — f32 or bf16 (I/O dtype follows x.dtype).

    params: dict of (in, out) weights + (1, out) biases (f32).
    Returns (recon (B, 52), mu (B, 16), logvar (B, 16)) in x.dtype.
    """
    B = x.shape[0]
    io_dtype = x.dtype
    itemsize = jnp.dtype(io_dtype).itemsize
    sub = 8 if itemsize == 4 else 16          # sublane packing: f32=8, bf16=16

    # Block sizing: single full-array block if the batch fits (always a legal
    # block shape), else tile at block_b rows (multiple of the sublane pack)
    # and let Pallas handle the ragged last block — no host-side padding copy.
    bb = min(block_b, B)
    if bb < B:
        bb = max(sub, _round_down(bb, sub))
    n_blocks = pl.cdiv(B, bb)

    # fuse the two encoder heads host-side (tiny, one-time)
    w_enc = jnp.concatenate([params["w21"], params["w22"]], axis=1)   # (32, 32)
    b_enc = jnp.concatenate([params["b21"], params["b22"]], axis=1)   # (1, 32)

    args = (x, eps,
            params["w1"], params["b1"],
            w_enc, b_enc,
            params["w3"], params["b3"],
            params["w4"], params["b4"])

    # weights/biases: full-shape blocks, constant index_map -> resident in VMEM
    weight_specs = [pl.BlockSpec(a.shape, lambda i: (0, 0)) for a in args[2:]]
    in_specs = [
        pl.BlockSpec((bb, IN_DIM), lambda i: (i, 0)),   # x block
        pl.BlockSpec((bb, Z_DIM), lambda i: (i, 0)),    # eps block
    ] + weight_specs

    # advisory cost estimate so XLA schedules neighbours around the custom call
    flops = 2 * B * (IN_DIM * H_DIM + H_DIM * 2 * Z_DIM + Z_DIM * H_DIM + H_DIM * OUT_DIM)
    transcendentals = B * (Z_DIM + OUT_DIM)             # exp + tanh
    weight_bytes = sum(int(a.size) * 4 for a in args[2:])
    bytes_accessed = B * (IN_DIM + Z_DIM + SLAB_DIM) * itemsize + weight_bytes

    out = pl.pallas_call(
        _vae_kernel,
        grid=(n_blocks,),
        out_shape=jax.ShapeDtypeStruct((B, SLAB_DIM), io_dtype),
        in_specs=in_specs,
        out_specs=pl.BlockSpec((bb, SLAB_DIM), lambda i: (i, 0)),
        compiler_params=pltpu.CompilerParams(
            dimension_semantics=("parallel",),          # megacore sharding on v7x
            # covers bb up to ~8192 on v5e/v6e (past the 16/32 MiB scoped
            # defaults) while staying under v7x's 64 MiB physical VMEM.
            vmem_limit_bytes=48 * 1024 * 1024,
        ),
        cost_estimate=pl.CostEstimate(
            flops=flops,
            transcendentals=transcendentals,
            bytes_accessed=bytes_accessed,
        ),
    )(*args)

    recon = out[:, :OUT_DIM]
    mu = out[:, OUT_DIM:OUT_DIM + Z_DIM]
    logvar = out[:, OUT_DIM + Z_DIM:]
    return recon, mu, logvar


def init_params(key):
    """Deterministic init mimicking nn.Linear default (uniform +-1/sqrt(fan_in)).

    Weights stored pre-transposed as (in, out); biases as (1, out)."""
    def linear(key, fan_in, fan_out):
        kw, kb = jax.random.split(key)
        bound = 1.0 / jnp.sqrt(fan_in)
        w = jax.random.uniform(kw, (fan_in, fan_out), jnp.float32, -bound, bound)
        b = jax.random.uniform(kb, (1, fan_out), jnp.float32, -bound, bound)
        return w, b

    k1, k21, k22, k3, k4 = jax.random.split(key, 5)
    w1, b1 = linear(k1, IN_DIM, H_DIM)
    w21, b21 = linear(k21, H_DIM, Z_DIM)
    w22, b22 = linear(k22, H_DIM, Z_DIM)
    w3, b3 = linear(k3, Z_DIM, H_DIM)
    w4, b4 = linear(k4, H_DIM, OUT_DIM)
    return dict(w1=w1, b1=b1, w21=w21, b21=b21, w22=w22, b22=b22,
                w3=w3, b3=b3, w4=w4, b4=b4)


def _reference_forward(x, eps, p):
    """Pure-JAX reference (f32) matching the PyTorch module's forward."""
    h1 = jnp.maximum(x @ p["w1"] + p["b1"], 0.0)
    mu = h1 @ p["w21"] + p["b21"]
    logvar = h1 @ p["w22"] + p["b22"]
    z = mu + eps * jnp.exp(0.5 * logvar)
    h3 = jnp.maximum(z @ p["w3"] + p["b3"], 0.0)
    recon = jax.nn.sigmoid(h3 @ p["w4"] + p["b4"])
    return recon, mu, logvar


def _check_f32(B, block_b, params, key):
    kx, ke = jax.random.split(key)
    x = jax.random.normal(kx, (B, IN_DIM), jnp.float32)
    eps = jax.random.normal(ke, (B, Z_DIM), jnp.float32)    # torch.randn_like(std)

    recon, mu, logvar = jax.block_until_ready(
        vae_forward(x, eps, params, block_b=block_b))

    r_ref, mu_ref, lv_ref = _reference_forward(x, eps, params)
    assert recon.shape == (B, OUT_DIM)
    assert mu.shape == (B, Z_DIM) and logvar.shape == (B, Z_DIM)
    assert jnp.allclose(mu, mu_ref, atol=1e-5)
    assert jnp.allclose(logvar, lv_ref, atol=1e-5)
    assert jnp.allclose(recon, r_ref, atol=1e-4)


def _check_bf16(B, block_b, params, key):
    kx, ke = jax.random.split(key)
    x = jax.random.normal(kx, (B, IN_DIM), jnp.float32).astype(jnp.bfloat16)
    eps = jax.random.normal(ke, (B, Z_DIM), jnp.float32).astype(jnp.bfloat16)

    recon, mu, logvar = jax.block_until_ready(
        vae_forward(x, eps, params, block_b=block_b))
    assert recon.dtype == jnp.bfloat16 and mu.dtype == jnp.bfloat16

    r_ref, mu_ref, lv_ref = _reference_forward(
        x.astype(jnp.float32), eps.astype(jnp.float32), params)
    assert jnp.allclose(recon.astype(jnp.float32), r_ref, atol=3e-2)
    assert jnp.allclose(mu.astype(jnp.float32), mu_ref, atol=3e-2)
    assert jnp.allclose(logvar.astype(jnp.float32), lv_ref, atol=3e-2)


if __name__ == "__main__":
    key = jax.random.PRNGKey(0)
    k_param, k1, k2, k3 = jax.random.split(key, 4)
    params = init_params(k_param)

    # 1) exact f32 path, single full-array block (default large block_b)
    _check_f32(B=16, block_b=4096, params=params, key=k1)
    # 2) exact f32 path, multi-block grid with a ragged last block (20 = 16 + 4)
    _check_f32(B=20, block_b=16, params=params, key=k2)
    # 3) bf16-streamed I/O path (halved HBM traffic), multi-block
    _check_bf16(B=64, block_b=32, params=params, key=k3)

    print("KERNEL_OK")
</pallas_src>

<mosaic_0001>
module attributes {stable_mosaic.version = 11 : i64} {
  func.func @_vae_kernel(%arg0: i32, %arg1: memref<16x84xf32, #tpu.memory_space<vmem>>, %arg2: memref<16x16xf32, #tpu.memory_space<vmem>>, %arg3: memref<84x32xf32, #tpu.memory_space<vmem>>, %arg4: memref<1x32xf32, #tpu.memory_space<vmem>>, %arg5: memref<32x32xf32, #tpu.memory_space<vmem>>, %arg6: memref<1x32xf32, #tpu.memory_space<vmem>>, %arg7: memref<16x32xf32, #tpu.memory_space<vmem>>, %arg8: memref<1x32xf32, #tpu.memory_space<vmem>>, %arg9: memref<32x52xf32, #tpu.memory_space<vmem>>, %arg10: memref<1x52xf32, #tpu.memory_space<vmem>>, %arg11: memref<16x84xf32, #tpu.memory_space<vmem>>) attributes {dimension_semantics = [#tpu.dimension_semantics<parallel>], iteration_bounds = array<i64: 1>, scalar_prefetch = 0 : i64, scratch_operands = 0 : i64, tpu.core_type = #tpu.core_type<tc>, window_params = [{transform_indices = @transform_0, window_bounds = array<i64: 16, 84>}, {transform_indices = @transform_1, window_bounds = array<i64: 16, 16>}, {pipeline_mode = #tpu.pipeline_mode<synchronous>, transform_indices = @transform_2, window_bounds = array<i64: 84, 32>}, {pipeline_mode = #tpu.pipeline_mode<synchronous>, transform_indices = @transform_3, window_bounds = array<i64: 1, 32>}, {pipeline_mode = #tpu.pipeline_mode<synchronous>, transform_indices = @transform_4, window_bounds = array<i64: 32, 32>}, {pipeline_mode = #tpu.pipeline_mode<synchronous>, transform_indices = @transform_5, window_bounds = array<i64: 1, 32>}, {pipeline_mode = #tpu.pipeline_mode<synchronous>, transform_indices = @transform_6, window_bounds = array<i64: 16, 32>}, {pipeline_mode = #tpu.pipeline_mode<synchronous>, transform_indices = @transform_7, window_bounds = array<i64: 1, 32>}, {pipeline_mode = #tpu.pipeline_mode<synchronous>, transform_indices = @transform_8, window_bounds = array<i64: 32, 52>}, {pipeline_mode = #tpu.pipeline_mode<synchronous>, transform_indices = @transform_9, window_bounds = array<i64: 1, 52>}, {transform_indices = @transform_10, window_bounds = array<i64: 16, 84>}]} {
    %c0 = arith.constant 0 : index
    %c0_0 = arith.constant 0 : index
    %0 = vector.load %arg1[%c0, %c0_0] : memref<16x84xf32, #tpu.memory_space<vmem>>, vector<16x84xf32>
    %c0_1 = arith.constant 0 : index
    %c0_2 = arith.constant 0 : index
    %1 = vector.load %arg3[%c0_1, %c0_2] : memref<84x32xf32, #tpu.memory_space<vmem>>, vector<84x32xf32>
    %cst = arith.constant dense<0.000000e+00> : vector<16x32xf32>
    %2 = tpu.matmul %0, %1, %cst {dimension_numbers = #tpu.dot_dimension_numbers<[1], [0], [0], [1], [0, 0, 1, 1], [], []>} : vector<16x84xf32>, vector<84x32xf32>, vector<16x32xf32> -> vector<16x32xf32>
    %c0_3 = arith.constant 0 : index
    %c0_4 = arith.constant 0 : index
    %3 = vector.load %arg4[%c0_3, %c0_4] : memref<1x32xf32, #tpu.memory_space<vmem>>, vector<1x32xf32>
    %4 = vector.broadcast %3 : vector<1x32xf32> to vector<16x32xf32>
    %5 = arith.addf %2, %4 : vector<16x32xf32>
    %cst_5 = arith.constant 0.000000e+00 : f32
    %6 = vector.broadcast %cst_5 : f32 to vector<16x32xf32>
    %7 = arith.maximumf %5, %6 : vector<16x32xf32>
    %c0_6 = arith.constant 0 : index
    %c0_7 = arith.constant 0 : index
    %8 = vector.load %arg5[%c0_6, %c0_7] : memref<32x32xf32, #tpu.memory_space<vmem>>, vector<32x32xf32>
    %cst_8 = arith.constant dense<0.000000e+00> : vector<16x32xf32>
    %9 = tpu.matmul %7, %8, %cst_8 {dimension_numbers = #tpu.dot_dimension_numbers<[1], [0], [0], [1], [0, 0, 1, 1], [], []>} : vector<16x32xf32>, vector<32x32xf32>, vector<16x32xf32> -> vector<16x32xf32>
    %c0_9 = arith.constant 0 : index
    %c0_10 = arith.constant 0 : index
    %10 = vector.load %arg6[%c0_9, %c0_10] : memref<1x32xf32, #tpu.memory_space<vmem>>, vector<1x32xf32>
    %11 = vector.broadcast %10 : vector<1x32xf32> to vector<16x32xf32>
    %12 = arith.addf %9, %11 : vector<16x32xf32>
    %13 = vector.extract_strided_slice %12 {offsets = [0, 0], sizes = [16, 16], strides = [1, 1]} : vector<16x32xf32> to vector<16x16xf32>
    %14 = vector.extract_strided_slice %12 {offsets = [0, 16], sizes = [16, 16], strides = [1, 1]} : vector<16x32xf32> to vector<16x16xf32>
    %c0_11 = arith.constant 0 : index
    %c0_12 = arith.constant 0 : index
    %15 = vector.load %arg2[%c0_11, %c0_12] : memref<16x16xf32, #tpu.memory_space<vmem>>, vector<16x16xf32>
    %cst_13 = arith.constant 5.000000e-01 : f32
    %16 = vector.broadcast %cst_13 : f32 to vector<16x16xf32>
    %17 = arith.mulf %16, %14 : vector<16x16xf32>
    %18 = math.exp %17 : vector<16x16xf32>
    %19 = arith.mulf %15, %18 : vector<16x16xf32>
    %20 = arith.addf %13, %19 : vector<16x16xf32>
    %c0_14 = arith.constant 0 : index
    %c0_15 = arith.constant 0 : index
    %21 = vector.load %arg7[%c0_14, %c0_15] : memref<16x32xf32, #tpu.memory_space<vmem>>, vector<16x32xf32>
    %cst_16 = arith.constant dense<0.000000e+00> : vector<16x32xf32>
    %22 = tpu.matmul %20, %21, %cst_16 {dimension_numbers = #tpu.dot_dimension_numbers<[1], [0], [0], [1], [0, 0, 1, 1], [], []>} : vector<16x16xf32>, vector<16x32xf32>, vector<16x32xf32> -> vector<16x32xf32>
    %c0_17 = arith.constant 0 : index
    %c0_18 = arith.constant 0 : index
    %23 = vector.load %arg8[%c0_17, %c0_18] : memref<1x32xf32, #tpu.memory_space<vmem>>, vector<1x32xf32>
    %24 = vector.broadcast %23 : vector<1x32xf32> to vector<16x32xf32>
    %25 = arith.addf %22, %24 : vector<16x32xf32>
    %cst_19 = arith.constant 0.000000e+00 : f32
    %26 = vector.broadcast %cst_19 : f32 to vector<16x32xf32>
    %27 = arith.maximumf %25, %26 : vector<16x32xf32>
    %c0_20 = arith.constant 0 : index
    %c0_21 = arith.constant 0 : index
    %28 = vector.load %arg9[%c0_20, %c0_21] : memref<32x52xf32, #tpu.memory_space<vmem>>, vector<32x52xf32>
    %cst_22 = arith.constant dense<0.000000e+00> : vector<16x52xf32>
    %29 = tpu.matmul %27, %28, %cst_22 {dimension_numbers = #tpu.dot_dimension_numbers<[1], [0], [0], [1], [0, 0, 1, 1], [], []>} : vector<16x32xf32>, vector<32x52xf32>, vector<16x52xf32> -> vector<16x52xf32>
    %c0_23 = arith.constant 0 : index
    %c0_24 = arith.constant 0 : index
    %30 = vector.load %arg10[%c0_23, %c0_24] : memref<1x52xf32, #tpu.memory_space<vmem>>, vector<1x52xf32>
    %31 = vector.broadcast %30 : vector<1x52xf32> to vector<16x52xf32>
    %32 = arith.addf %29, %31 : vector<16x52xf32>
    %cst_25 = arith.constant 5.000000e-01 : f32
    %33 = vector.broadcast %cst_25 : f32 to vector<16x52xf32>
    %34 = arith.mulf %33, %32 : vector<16x52xf32>
    %35 = math.tanh %34 : vector<16x52xf32>
    %cst_26 = arith.constant 5.000000e-01 : f32
    %36 = vector.broadcast %cst_26 : f32 to vector<16x52xf32>
    %37 = arith.mulf %36, %35 : vector<16x52xf32>
    %cst_27 = arith.constant 5.000000e-01 : f32
    %38 = vector.broadcast %cst_27 : f32 to vector<16x52xf32>
    %39 = arith.addf %37, %38 : vector<16x52xf32>
    %c0_28 = arith.constant 0 : index
    %c0_29 = arith.constant 0 : index
    %40 = vector.load %arg11[%c0_28, %c0_29] : memref<16x84xf32, #tpu.memory_space<vmem>>, vector<16x52xf32>
    tpu.vector_store %arg11[%c0_28, %c0_29], %39 {strides = array<i32>} : memref<16x84xf32, #tpu.memory_space<vmem>>, vector<16x52xf32>,
    %c0_30 = arith.constant 0 : index
    %c52 = arith.constant 52 : index
    %41 = vector.load %arg11[%c0_30, %c52] : memref<16x84xf32, #tpu.memory_space<vmem>>, vector<16x32xf32>
    tpu.vector_store %arg11[%c0_30, %c52], %12 {strides = array<i32>} : memref<16x84xf32, #tpu.memory_space<vmem>>, vector<16x32xf32>,
    return
  }
  func.func @transform_0(%arg0: i32) -> (i32, i32) {
    %c0_i32 = arith.constant 0 : i32
    %c0_i32_0 = arith.constant 0 : i32
    return %arg0, %c0_i32 : i32, i32
  }
  func.func @transform_1(%arg0: i32) -> (i32, i32) {
    %c0_i32 = arith.constant 0 : i32
    %c0_i32_0 = arith.constant 0 : i32
    return %arg0, %c0_i32 : i32, i32
  }
  func.func @transform_2(%arg0: i32) -> (i32, i32) {
    %c0_i32 = arith.constant 0 : i32
    %c0_i32_0 = arith.constant 0 : i32
    %c0_i32_1 = arith.constant 0 : i32
    return %c0_i32, %c0_i32_0 : i32, i32
  }
  func.func @transform_3(%arg0: i32) -> (i32, i32) {
    %c0_i32 = arith.constant 0 : i32
    %c0_i32_0 = arith.constant 0 : i32
    %c0_i32_1 = arith.constant 0 : i32
    return %c0_i32, %c0_i32_0 : i32, i32
  }
  func.func @transform_4(%arg0: i32) -> (i32, i32) {
    %c0_i32 = arith.constant 0 : i32
    %c0_i32_0 = arith.constant 0 : i32
    %c0_i32_1 = arith.constant 0 : i32
    return %c0_i32, %c0_i32_0 : i32, i32
  }
  func.func @transform_5(%arg0: i32) -> (i32, i32) {
    %c0_i32 = arith.constant 0 : i32
    %c0_i32_0 = arith.constant 0 : i32
    %c0_i32_1 = arith.constant 0 : i32
    return %c0_i32, %c0_i32_0 : i32, i32
  }
  func.func @transform_6(%arg0: i32) -> (i32, i32) {
    %c0_i32 = arith.constant 0 : i32
    %c0_i32_0 = arith.constant 0 : i32
    %c0_i32_1 = arith.constant 0 : i32
    return %c0_i32, %c0_i32_0 : i32, i32
  }
  func.func @transform_7(%arg0: i32) -> (i32, i32) {
    %c0_i32 = arith.constant 0 : i32
    %c0_i32_0 = arith.constant 0 : i32
    %c0_i32_1 = arith.constant 0 : i32
    return %c0_i32, %c0_i32_0 : i32, i32
  }
  func.func @transform_8(%arg0: i32) -> (i32, i32) {
    %c0_i32 = arith.constant 0 : i32
    %c0_i32_0 = arith.constant 0 : i32
    %c0_i32_1 = arith.constant 0 : i32
    return %c0_i32, %c0_i32_0 : i32, i32
  }
  func.func @transform_9(%arg0: i32) -> (i32, i32) {
    %c0_i32 = arith.constant 0 : i32
    %c0_i32_0 = arith.constant 0 : i32
    %c0_i32_1 = arith.constant 0 : i32
    return %c0_i32, %c0_i32_0 : i32, i32
  }
  func.func @transform_10(%arg0: i32) -> (i32, i32) {
    %c0_i32 = arith.constant 0 : i32
    %c0_i32_0 = arith.constant 0 : i32
    return %arg0, %c0_i32 : i32, i32
  }
}

</mosaic_0001>

<llo_original>
// kernel: tpu_custom_call.1
$region0: #{tpu_custom_call.1}
  #allocation0 [shape = 'u32[]', space=smem, size = 0x4, offset = 0x4, fixed_abs, tag = 'smem constant byte address 0x4 - core index']
  #allocation1 [shape = 'u32[144,128]{1,0:T(1,128)}', space=vmem, size = 0x12000, scoped, tag = 'internal scratch']
  %s0 = inlined_call_operand.vmem [shape: f32[16,84], index: 0, kind: input, shape index: {}]
  %s1 = inlined_call_operand.vmem [shape: f32[16,16], index: 1, kind: input, shape index: {}]
  %s2 = inlined_call_operand.vmem [shape: f32[84,32], index: 2, kind: input, shape index: {}]
  %s3 = inlined_call_operand.vmem [shape: f32[1,32], index: 3, kind: input, shape index: {}]
  %s4 = inlined_call_operand.vmem [shape: f32[32,32], index: 4, kind: input, shape index: {}]
  %s5 = inlined_call_operand.vmem [shape: f32[1,32], index: 5, kind: input, shape index: {}]
  %s6 = inlined_call_operand.vmem [shape: f32[16,32], index: 6, kind: input, shape index: {}]
  %s7 = inlined_call_operand.vmem [shape: f32[1,32], index: 7, kind: input, shape index: {}]
  %s8 = inlined_call_operand.vmem [shape: f32[32,52], index: 8, kind: input, shape index: {}]
  %s9 = inlined_call_operand.vmem [shape: f32[1,52], index: 9, kind: input, shape index: {}]
  %s10 = inlined_call_operand.hbm [shape: f32[16,84], index: 10, kind: output, shape index: {}]
  %s11 = sld [smem:[#allocation0]]
  $region50: #{tpu_custom_call.1} parent=0
    _
  %s13 = ssub.s32 1, %s11
  %s14 = scalar_select 0, %s13, %s11
  $region1: #{tpu_custom_call.1} parent=0
    #allocation2 [shape = 'u8[8192]{0}', space=vmem, size = 0x2000, scoped, tag = 'output window, operand 0, single buffered']
    #allocation3 [shape = 's32[1]{0}', space=sflag, size = 0x4, scoped, tag = 'scoped memory for tpu_custom_call.1']
    %15 = vsyncpa [#allocation3], 0
    // Predicated region
    $region2: #{tpu_custom_call.1} parent=1 // pred_check
      _
    $region3: #{tpu_custom_call.1} parent=1 // pred_check_branch
      %17 = sbr.rel (0) target = $region5
    $region4: #{tpu_custom_call.1} parent=1 // pred_region
      _
    $region5: #{tpu_custom_call.1} parent=1 // pred_fallthru
      _
    // Predicated region
    $region6: #{tpu_custom_call.1} parent=1 // pred_check
      _
    $region7: #{tpu_custom_call.1} parent=1 // pred_check_branch
      %19 = sbr.rel (0) target = $region9
    $region8: #{tpu_custom_call.1} parent=1 // pred_region
      _
    $region9: #{tpu_custom_call.1} parent=1 // pred_fallthru
      _
    // Predicated region
    $region10: #{tpu_custom_call.1} parent=1 // pred_check
      _
    $region11: #{tpu_custom_call.1} parent=1 // pred_check_branch
      %21 = sbr.rel (0) target = $region13
    $region12: #{tpu_custom_call.1} parent=1 // pred_region
      _
    $region13: #{tpu_custom_call.1} parent=1 // pred_fallthru
      _
    // Predicated region
    $region14: #{tpu_custom_call.1} parent=1 // pred_check
      _
    $region15: #{tpu_custom_call.1} parent=1 // pred_check_branch
      %23 = sbr.rel (0) target = $region17
    $region16: #{tpu_custom_call.1} parent=1 // pred_region
      _
    $region17: #{tpu_custom_call.1} parent=1 // pred_fallthru
      _
    // Predicated region
    $region18: #{tpu_custom_call.1} parent=1 // pred_check
      _
    $region19: #{tpu_custom_call.1} parent=1 // pred_check_branch
      %25 = sbr.rel (0) target = $region21
    $region20: #{tpu_custom_call.1} parent=1 // pred_region
      _
    $region21: #{tpu_custom_call.1} parent=1 // pred_fallthru
      _
    // Predicated region
    $region22: #{tpu_custom_call.1} parent=1 // pred_check
      _
    $region23: #{tpu_custom_call.1} parent=1 // pred_check_branch
      %27 = sbr.rel (0) target = $region25
    $region24: #{tpu_custom_call.1} parent=1 // pred_region
      _
    $region25: #{tpu_custom_call.1} parent=1 // pred_fallthru
      _
    // Predicated region
    $region26: #{tpu_custom_call.1} parent=1 // pred_check
      _
    $region27: #{tpu_custom_call.1} parent=1 // pred_check_branch
      %29 = sbr.rel (0) target = $region29
    $region28: #{tpu_custom_call.1} parent=1 // pred_region
      _
    $region29: #{tpu_custom_call.1} parent=1 // pred_fallthru
      _
    // Predicated region
    $region30: #{tpu_custom_call.1} parent=1 // pred_check
      _
    $region31: #{tpu_custom_call.1} parent=1 // pred_check_branch
      %31 = sbr.rel (0) target = $region33
    $region32: #{tpu_custom_call.1} parent=1 // pred_region
      _
    $region33: #{tpu_custom_call.1} parent=1 // pred_fallthru
      _
    // Predicated region
    $region34: #{tpu_custom_call.1} parent=1 // pred_check
      _
    $region35: #{tpu_custom_call.1} parent=1 // pred_check_branch
      %33 = sbr.rel (0) target = $region37
    $region36: #{tpu_custom_call.1} parent=1 // pred_region
      _
    $region37: #{tpu_custom_call.1} parent=1 // pred_fallthru
      _
    // Predicated region
    $region38: #{tpu_custom_call.1} parent=1 // pred_check
      _
    $region39: #{tpu_custom_call.1} parent=1 // pred_check_branch
      %35 = sbr.rel (0) target = $region41
    $region40: #{tpu_custom_call.1} parent=1 // pred_region
      _
    $region41: #{tpu_custom_call.1} parent=1 // pred_fallthru
      _
    %v36 = vld [vmem:[%s0] sm:$0xff]
    %v37 = vld [vmem:[%s0 + $0x8] sm:$0xff]
    %v38 = vld [vmem:[%s2] sm:$0xff]
    %v39 = vld [vmem:[%s2 + $0x8] sm:$0xff]
    %v40 = vld [vmem:[%s2 + $0x10] sm:$0xff]
    %v41 = vld [vmem:[%s2 + $0x18] sm:$0xff]
    %v42 = vld [vmem:[%s2 + $0x20] sm:$0xff]
    %v43 = vld [vmem:[%s2 + $0x28] sm:$0xff]
    %v44 = vld [vmem:[%s2 + $0x30] sm:$0xff]
    %v45 = vld [vmem:[%s2 + $0x38] sm:$0xff]
    %v46 = vld [vmem:[%s2 + $0x40] sm:$0xff]
    %v47 = vld [vmem:[%s2 + $0x48] sm:$0xff]
    %v48 = vld [vmem:[%s2 + $0x50] sm:$0xf]
    %v49 = vld [vmem:[%s3] sm:$0x1]
    %v51 = vlaneseq
    %v52 = vshrl.u32 %v51, 7
    %v53 = vsub.s32 0, %v52
    %v54 = vrot.slane %v49, %v53
    %vm56 = vcmask 687104
    %v58 = vsel %vm56, %v36, 0
    %v61 = vsel %vm56, %v37, 0
    %vm63 = vcmask 1043456
    %v65 = vsel %vm63, %v48, 0
    %67 = vmatprep.subr.mxu0 0.0
    %68 = vmatpush1.msra.mxu0 %v38
    %69 = vmatprep.subr.mxu0 0.0
    %70 = vmatpush1.msra.mxu0 %v39
    %71 = vmatprep.subr.mxu0 0.0
    %72 = vmatpush1.msra.mxu0 %v40
    %73 = vmatprep.subr.mxu0 0.0
    %74 = vmatpush1.msra.mxu0 %v41
    %75 = vmatprep.subr.mxu0 0.0
    %76 = vmatpush1.msra.mxu0 %v42
    %77 = vmatprep.subr.mxu0 0.0
    %78 = vmatpush1.msra.mxu0 %v43
    %79 = vmatprep.subr.mxu0 0.0
    %80 = vmatpush1.msra.mxu0 %v44
    %81 = vmatprep.subr.mxu0 0.0
    %82 = vmatpush1.msra.mxu0 %v45
    %83 = vmatprep.subr.mxu0 0.0
    %84 = vmatpush1.msra.mxu0 %v46
    %85 = vmatprep.subr.mxu0 0.0
    %86 = vmatpush1.msra.mxu0 %v47
    %87 = vmatprep.subr.mxu0 0.0
    %88 = vmatpush1.msra.mxu0 %v65
    %89 = vmatprep.subr.mxu0 0.0
    %90 = vmatpush1.msra.mxu0 0.0
    %91 = vmatprep.subr.mxu0 0.0
    %92 = vmatpush1.msra.mxu0 0.0
    %93 = vmatprep.subr.mxu0 0.0
    %94 = vmatpush1.msra.mxu0 0.0
    %95 = vmatprep.subr.mxu0 0.0
    %96 = vmatpush1.msra.mxu0 0.0
    %97 = vmatprep.subr.mxu0 0.0
    %98 = vmatpush1.msra.mxu0 0.0
    %99 = vmatprep.subr.mxu0 0.0
    %100 = vmatpush1.msra.mxu0 0.0
    %101 = vmatprep.subr.mxu0 0.0
    %102 = vmatpush1.msra.mxu0 0.0
    %103 = vmatprep.subr.mxu0 0.0
    %104 = vmatpush1.msra.mxu0 0.0
    %105 = vmatprep.subr.mxu0 0.0
    %106 = vmatpush1.msra.mxu0 0.0
    %107 = vmatprep.subr.mxu0 0.0
    %108 = vmatpush1.msra.mxu0 0.0
    %109 = vmatprep.subr.mxu0 0.0
    %110 = vmatpush1.msra.mxu0 0.0
    %111 = vmatprep.subr.mxu0 0.0
    %112 = vmatpush1.msra.mxu0 0.0
    %113 = vmatprep.subr.mxu0 0.0
    %114 = vmatpush1.msra.mxu0 0.0
    %115 = vmatprep.subr.mxu0 0.0
    %116 = vmatpush1.msra.mxu0 0.0
    %117 = vmatprep.subr.mxu0 0.0
    %118 = vmatpush1.msra.mxu0 0.0
    %119 = vmatprep.subr.mxu0 0.0
    %120 = vmatpush1.msra.mxu0 0.0
    %121 = vmatprep.subr.mxu0 0.0
    %122 = vmatpush1.msra.mxu0 0.0
    %123 = vmatprep.subr.mxu0 0.0
    %124 = vmatpush1.msra.mxu0 0.0
    %125 = vmatprep.subr.mxu0 0.0
    %126 = vmatpush1.msra.mxu0 0.0
    %127 = vmatprep.subr.mxu0 0.0
    %128 = vmatpush1.msra.mxu0 0.0
    %129 = vmatprep.subr.mxu0 0.0
    %130 = vmatpush1.msra.mxu0 0.0
    %131 = vmatprep.mubr.f32.mxu0 0.0
    %132 = vmatmul.mubr.f32.gmra.mrb[0].mxu0 %v58
    %v133 = vpop.f32.mrb[0].mxu0
    %v134 = vadd.f32 %v54, %v133
    %v135 = vpop.f32.mrb[0].mxu0
    %136 = vmatprep.mubr.f32.mxu0 0.0
    %137 = vmatmul.mubr.f32.gmra.mrb[0].mxu0 %v61
    %v138 = vpop.f32.mrb[0].mxu0
    %v139 = vadd.f32 %v54, %v138
    %v140 = vpop.f32.mrb[0].mxu0
    %141 = vdwg.mxu0
    %v142 = vmax.f32 %v134, 0.0
    %v143 = vmax.f32 %v139, 0.0
    %v144 = vld [vmem:[%s4] sm:$0xff]
    %v145 = vld [vmem:[%s4 + $0x8] sm:$0xff]
    %v146 = vld [vmem:[%s4 + $0x10] sm:$0xff]
    %v147 = vld [vmem:[%s4 + $0x18] sm:$0xff]
    %v148 = vld [vmem:[%s5] sm:$0x1]
    %v150 = vlaneseq
    %v151 = vshrl.u32 %v150, 7
    %v152 = vsub.s32 0, %v151
    %v153 = vrot.slane %v148, %v152
    %vm155 = vcmask 261120
    %v157 = vsel %vm155, %v142, 0
    %v160 = vsel %vm155, %v143, 0
    %162 = vmatprep.subr.mxu0 0.0
    %163 = vmatpush1.msra.mxu0 %v144
    %164 = vmatprep.subr.mxu0 0.0
    %165 = vmatpush1.msra.mxu0 %v145
    %166 = vmatprep.subr.mxu0 0.0
    %167 = vmatpush1.msra.mxu0 %v146
    %168 = vmatprep.subr.mxu0 0.0
    %169 = vmatpush1.msra.mxu0 %v147
    %170 = vmatprep.subr.mxu0 0.0
    %171 = vmatpush1.msra.mxu0 0.0
    %172 = vmatprep.subr.mxu0 0.0
    %173 = vmatpush1.msra.mxu0 0.0
    %174 = vmatprep.subr.mxu0 0.0
    %175 = vmatpush1.msra.mxu0 0.0
    %176 = vmatprep.subr.mxu0 0.0
    %177 = vmatpush1.msra.mxu0 0.0
    %178 = vmatprep.subr.mxu0 0.0
    %179 = vmatpush1.msra.mxu0 0.0
    %180 = vmatprep.subr.mxu0 0.0
    %181 = vmatpush1.msra.mxu0 0.0
    %182 = vmatprep.subr.mxu0 0.0
    %183 = vmatpush1.msra.mxu0 0.0
    %184 = vmatprep.subr.mxu0 0.0
    %185 = vmatpush1.msra.mxu0 0.0
    %186 = vmatprep.subr.mxu0 0.0
    %187 = vmatpush1.msra.mxu0 0.0
    %188 = vmatprep.subr.mxu0 0.0
    %189 = vmatpush1.msra.mxu0 0.0
    %190 = vmatprep.subr.mxu0 0.0
    %191 = vmatpush1.msra.mxu0 0.0
    %192 = vmatprep.subr.mxu0 0.0
    %193 = vmatpush1.msra.mxu0 0.0
    %194 = vmatprep.subr.mxu0 0.0
    %195 = vmatpush1.msra.mxu0 0.0
    %196 = vmatprep.subr.mxu0 0.0
    %197 = vmatpush1.msra.mxu0 0.0
    %198 = vmatprep.subr.mxu0 0.0
    %199 = vmatpush1.msra.mxu0 0.0
    %200 = vmatprep.subr.mxu0 0.0
    %201 = vmatpush1.msra.mxu0 0.0
    %202 = vmatprep.subr.mxu0 0.0
    %203 = vmatpush1.msra.mxu0 0.0
    %204 = vmatprep.subr.mxu0 0.0
    %205 = vmatpush1.msra.mxu0 0.0
    %206 = vmatprep.subr.mxu0 0.0
    %207 = vmatpush1.msra.mxu0 0.0
    %208 = vmatprep.subr.mxu0 0.0
    %209 = vmatpush1.msra.mxu0 0.0
    %210 = vmatprep.subr.mxu0 0.0
    %211 = vmatpush1.msra.mxu0 0.0
    %212 = vmatprep.subr.mxu0 0.0
    %213 = vmatpush1.msra.mxu0 0.0
    %214 = vmatprep.subr.mxu0 0.0
    %215 = vmatpush1.msra.mxu0 0.0
    %216 = vmatprep.subr.mxu0 0.0
    %217 = vmatpush1.msra.mxu0 0.0
    %218 = vmatprep.subr.mxu0 0.0
    %219 = vmatpush1.msra.mxu0 0.0
    %220 = vmatprep.subr.mxu0 0.0
    %221 = vmatpush1.msra.mxu0 0.0
    %222 = vmatprep.subr.mxu0 0.0
    %223 = vmatpush1.msra.mxu0 0.0
    %224 = vmatprep.subr.mxu0 0.0
    %225 = vmatpush1.msra.mxu0 0.0
    %226 = vmatprep.mubr.f32.mxu0 0.0
    %227 = vmatmul.mubr.f32.gmra.mrb[0].mxu0 %v157
    %v228 = vpop.f32.mrb[0].mxu0
    %v229 = vadd.f32 %v153, %v228
    %v230 = vpop.f32.mrb[0].mxu0
    %231 = vmatprep.mubr.f32.mxu0 0.0
    %232 = vmatmul.mubr.f32.gmra.mrb[0].mxu0 %v160
    %v233 = vpop.f32.mrb[0].mxu0
    %v234 = vadd.f32 %v153, %v233
    %v235 = vpop.f32.mrb[0].mxu0
    %236 = vdwg.mxu0
    %v237 = vld [vmem:[%s1] sm:$0xff]
    %v238 = vld [vmem:[%s1 + $0x8] sm:$0xff]
    %v239 = vmul.f32 %v229, 0.5
    %v240 = vmul.f32 %v234, 0.5
    %v241 = vmul.f32 %v239, 1.442695
    %v242 = vpow.pop %v241
    %v243 = vmul.f32 %v240, 1.442695
    %v244 = vpow.pop %v243
    %247 = vrot.lane.b32.xlu0 %v242, 112
    %v248 = vpop.permute.xlu0 %247
    %249 = vrot.lane.b32.xlu0 %v244, 112
    %v250 = vpop.permute.xlu0 %249
    %v253 = vmul.f32 %v237, %v248
    %v254 = vmul.f32 %v238, %v250
    %v255 = vadd.f32 %v229, %v253
    %v256 = vadd.f32 %v234, %v254
    %v257 = vld [vmem:[%s6] sm:$0xff]
    %v258 = vld [vmem:[%s6 + $0x8] sm:$0xff]
    %v259 = vld [vmem:[%s7] sm:$0x1]
    %v261 = vlaneseq
    %v262 = vshrl.u32 %v261, 7
    %v263 = vsub.s32 0, %v262
    %v264 = vrot.slane %v259, %v263
    %vm266 = vcmask 130048
    %v268 = vsel %vm266, %v255, 0
    %v271 = vsel %vm266, %v256, 0
    %273 = vmatprep.subr.mxu0 0.0
    %274 = vmatpush1.msra.mxu0 %v257
    %275 = vmatprep.subr.mxu0 0.0
    %276 = vmatpush1.msra.mxu0 %v258
    %277 = vmatprep.subr.mxu0 0.0
    %278 = vmatpush1.msra.mxu0 0.0
    %279 = vmatprep.subr.mxu0 0.0
    %280 = vmatpush1.msra.mxu0 0.0
    %281 = vmatprep.subr.mxu0 0.0
    %282 = vmatpush1.msra.mxu0 0.0
    %283 = vmatprep.subr.mxu0 0.0
    %284 = vmatpush1.msra.mxu0 0.0
    %285 = vmatprep.subr.mxu0 0.0
    %286 = vmatpush1.msra.mxu0 0.0
    %287 = vmatprep.subr.mxu0 0.0
    %288 = vmatpush1.msra.mxu0 0.0
    %289 = vmatprep.subr.mxu0 0.0
    %290 = vmatpush1.msra.mxu0 0.0
    %291 = vmatprep.subr.mxu0 0.0
    %292 = vmatpush1.msra.mxu0 0.0
    %293 = vmatprep.subr.mxu0 0.0
    %294 = vmatpush1.msra.mxu0 0.0
    %295 = vmatprep.subr.mxu0 0.0
    %296 = vmatpush1.msra.mxu0 0.0
    %297 = vmatprep.subr.mxu0 0.0
    %298 = vmatpush1.msra.mxu0 0.0
    %299 = vmatprep.subr.mxu0 0.0
    %300 = vmatpush1.msra.mxu0 0.0
    %301 = vmatprep.subr.mxu0 0.0
    %302 = vmatpush1.msra.mxu0 0.0
    %303 = vmatprep.subr.mxu0 0.0
    %304 = vmatpush1.msra.mxu0 0.0
    %305 = vmatprep.subr.mxu0 0.0
    %306 = vmatpush1.msra.mxu0 0.0
    %307 = vmatprep.subr.mxu0 0.0
    %308 = vmatpush1.msra.mxu0 0.0
    %309 = vmatprep.subr.mxu0 0.0
    %310 = vmatpush1.msra.mxu0 0.0
    %311 = vmatprep.subr.mxu0 0.0
    %312 = vmatpush1.msra.mxu0 0.0
    %313 = vmatprep.subr.mxu0 0.0
    %314 = vmatpush1.msra.mxu0 0.0
    %315 = vmatprep.subr.mxu0 0.0
    %316 = vmatpush1.msra.mxu0 0.0
    %317 = vmatprep.subr.mxu0 0.0
    %318 = vmatpush1.msra.mxu0 0.0
    %319 = vmatprep.subr.mxu0 0.0
    %320 = vmatpush1.msra.mxu0 0.0
    %321 = vmatprep.subr.mxu0 0.0
    %322 = vmatpush1.msra.mxu0 0.0
    %323 = vmatprep.subr.mxu0 0.0
    %324 = vmatpush1.msra.mxu0 0.0
    %325 = vmatprep.subr.mxu0 0.0
    %326 = vmatpush1.msra.mxu0 0.0
    %327 = vmatprep.subr.mxu0 0.0
    %328 = vmatpush1.msra.mxu0 0.0
    %329 = vmatprep.subr.mxu0 0.0
    %330 = vmatpush1.msra.mxu0 0.0
    %331 = vmatprep.subr.mxu0 0.0
    %332 = vmatpush1.msra.mxu0 0.0
    %333 = vmatprep.subr.mxu0 0.0
    %334 = vmatpush1.msra.mxu0 0.0
    %335 = vmatprep.subr.mxu0 0.0
    %336 = vmatpush1.msra.mxu0 0.0
    %337 = vmatprep.mubr.f32.mxu0 0.0
    %338 = vmatmul.mubr.f32.gmra.mrb[0].mxu0 %v268
    %v339 = vpop.f32.mrb[0].mxu0
    %v340 = vadd.f32 %v264, %v339
    %v341 = vpop.f32.mrb[0].mxu0
    %342 = vmatprep.mubr.f32.mxu0 0.0
    %343 = vmatmul.mubr.f32.gmra.mrb[0].mxu0 %v271
    %v344 = vpop.f32.mrb[0].mxu0
    %v345 = vadd.f32 %v264, %v344
    %v346 = vpop.f32.mrb[0].mxu0
    %347 = vdwg.mxu0
    %v348 = vmax.f32 %v340, 0.0
    %v349 = vmax.f32 %v345, 0.0
    %v350 = vld [vmem:[%s8] sm:$0xff]
    %v351 = vld [vmem:[%s8 + $0x8] sm:$0xff]
    %v352 = vld [vmem:[%s8 + $0x10] sm:$0xff]
    %v353 = vld [vmem:[%s8 + $0x18] sm:$0xff]
    %v354 = vld [vmem:[%s9] sm:$0x1]
    %v356 = vlaneseq
    %v357 = vshrl.u32 %v356, 7
    %v358 = vsub.s32 0, %v357
    %v359 = vrot.slane %v354, %v358
    %v362 = vsel %vm155, %v348, 0
    %v365 = vsel %vm155, %v349, 0
    %367 = vmatprep.subr.mxu0 0.0
    %368 = vmatpush1.msra.mxu0 %v350
    %369 = vmatprep.subr.mxu0 0.0
    %370 = vmatpush1.msra.mxu0 %v351
    %371 = vmatprep.subr.mxu0 0.0
    %372 = vmatpush1.msra.mxu0 %v352
    %373 = vmatprep.subr.mxu0 0.0
    %374 = vmatpush1.msra.mxu0 %v353
    %375 = vmatprep.subr.mxu0 0.0
    %376 = vmatpush1.msra.mxu0 0.0
    %377 = vmatprep.subr.mxu0 0.0
    %378 = vmatpush1.msra.mxu0 0.0
    %379 = vmatprep.subr.mxu0 0.0
    %380 = vmatpush1.msra.mxu0 0.0
    %381 = vmatprep.subr.mxu0 0.0
    %382 = vmatpush1.msra.mxu0 0.0
    %383 = vmatprep.subr.mxu0 0.0
    %384 = vmatpush1.msra.mxu0 0.0
    %385 = vmatprep.subr.mxu0 0.0
    %386 = vmatpush1.msra.mxu0 0.0
    %387 = vmatprep.subr.mxu0 0.0
    %388 = vmatpush1.msra.mxu0 0.0
    %389 = vmatprep.subr.mxu0 0.0
    %390 = vmatpush1.msra.mxu0 0.0
    %391 = vmatprep.subr.mxu0 0.0
    %392 = vmatpush1.msra.mxu0 0.0
    %393 = vmatprep.subr.mxu0 0.0
    %394 = vmatpush1.msra.mxu0 0.0
    %395 = vmatprep.subr.mxu0 0.0
    %396 = vmatpush1.msra.mxu0 0.0
    %397 = vmatprep.subr.mxu0 0.0
    %398 = vmatpush1.msra.mxu0 0.0
    %399 = vmatprep.subr.mxu0 0.0
    %400 = vmatpush1.msra.mxu0 0.0
    %401 = vmatprep.subr.mxu0 0.0
    %402 = vmatpush1.msra.mxu0 0.0
    %403 = vmatprep.subr.mxu0 0.0
    %404 = vmatpush1.msra.mxu0 0.0
    %405 = vmatprep.subr.mxu0 0.0
    %406 = vmatpush1.msra.mxu0 0.0
    %407 = vmatprep.subr.mxu0 0.0
    %408 = vmatpush1.msra.mxu0 0.0
    %409 = vmatprep.subr.mxu0 0.0
    %410 = vmatpush1.msra.mxu0 0.0
    %411 = vmatprep.subr.mxu0 0.0
    %412 = vmatpush1.msra.mxu0 0.0
    %413 = vmatprep.subr.mxu0 0.0
    %414 = vmatpush1.msra.mxu0 0.0
    %415 = vmatprep.subr.mxu0 0.0
    %416 = vmatpush1.msra.mxu0 0.0
    %417 = vmatprep.subr.mxu0 0.0
    %418 = vmatpush1.msra.mxu0 0.0
    %419 = vmatprep.subr.mxu0 0.0
    %420 = vmatpush1.msra.mxu0 0.0
    %421 = vmatprep.subr.mxu0 0.0
    %422 = vmatpush1.msra.mxu0 0.0
    %423 = vmatprep.subr.mxu0 0.0
    %424 = vmatpush1.msra.mxu0 0.0
    %425 = vmatprep.subr.mxu0 0.0
    %426 = vmatpush1.msra.mxu0 0.0
    %427 = vmatprep.subr.mxu0 0.0
    %428 = vmatpush1.msra.mxu0 0.0
    %429 = vmatprep.subr.mxu0 0.0
    %430 = vmatpush1.msra.mxu0 0.0
    %431 = vmatprep.mubr.f32.mxu0 0.0
    %432 = vmatmul.mubr.f32.gmra.mrb[0].mxu0 %v362
    %v433 = vpop.f32.mrb[0].mxu0
    %v434 = vadd.f32 %v359, %v433
    %v435 = vpop.f32.mrb[0].mxu0
    %436 = vmatprep.mubr.f32.mxu0 0.0
    %437 = vmatmul.mubr.f32.gmra.mrb[0].mxu0 %v365
    %v438 = vpop.f32.mrb[0].mxu0
    %v439 = vadd.f32 %v359, %v438
    %v440 = vpop.f32.mrb[0].mxu0
    %441 = vdwg.mxu0
    %v442 = vmul.f32 %v434, 0.5
    %v443 = vmul.f32 %v439, 0.5
    %v444 = vtanh.pop %v442
    %v445 = vtanh.pop %v443
    %v446 = vmul.f32 %v444, 0.5
    %v447 = vmul.f32 %v445, 0.5
    %v448 = vadd.f32 %v446, 0.5
    %v449 = vadd.f32 %v447, 0.5
    %vm450 = vcmask 424960
    %451 = vst.msk [vmem:[#allocation2] sm:$0xff] %vm450, %v448
    %452 = vst.msk [vmem:[#allocation2 + $0x8] sm:$0xff] %vm450, %v449
    %455 = vrot.lane.b32.xlu0 %v229, 52
    %v456 = vpop.permute.xlu0 %455
    %457 = vrot.lane.b32.xlu0 %v234, 52
    %v458 = vpop.permute.xlu0 %457
    %vm461 = vcmask 687520
    %462 = vst.msk [vmem:[#allocation2] sm:$0xff] %vm461, %v456
    %463 = vst.msk [vmem:[#allocation2 + $0x8] sm:$0xff] %vm461, %v458
    // Predicated region
    $region42: #{tpu_custom_call.1} parent=1 // pred_check
      _
    $region43: #{tpu_custom_call.1} parent=1 // pred_check_branch
      %465 = sbr.rel (0) target = $region45
    $region44: #{tpu_custom_call.1} parent=1 // pred_region
      %s467 = ssub.s32 256, 256
      %468 = vsyncadd [#allocation3], %s467
      %s469 = sshll.u32 [#allocation2], 4
      %s470 = int_to_ptr.vmem [resolvable:$true] %s469
      %475 = dma.vmem_to_hbm [thread:$0]  %s470, 256, %s10, [#allocation3], 128, 128, 8
    $region45: #{tpu_custom_call.1} parent=1 // pred_fallthru
      _
    // Predicated region
    $region46: #{tpu_custom_call.1} parent=1 // pred_check
      _
    $region47: #{tpu_custom_call.1} parent=1 // pred_check_branch
      %477 = sbr.rel (0) target = $region49
    $region48: #{tpu_custom_call.1} parent=1 // pred_region
      %478 = dma.done [#allocation3], 256
    $region49: #{tpu_custom_call.1} parent=1 // pred_fallthru
      _
    %479 = vsyncpa [#allocation3], 1

</llo_original>
